<compile_context>
chip_gen: v6e
topology: v6e:2x2x1
jax: 0.10.0
libtpu: 0.0.40
codegen_flags: <defaults>
</compile_context>

<pallas_src>
import functools

import jax
import jax.numpy as jnp
from jax import lax
from jax.experimental import pallas as pl
from jax.experimental.pallas import tpu as pltpu


def _round_up(x, m):
    return ((x + m - 1) // m) * m


def _cdiv(a, b):
    return (a + b - 1) // b


def alpha_loss_kernel(batch_ref, targets_ref, out_ref, acc_ref, *,
                      alpha, n_samples, tile_n, bpc, needs_mask):
    p = pl.program_id(0)   # core / parallel axis
    j = pl.program_id(1)   # row-block axis (serial reduction per core)

    @pl.when(j == 0)
    def _init():
        acc_ref[...] = jnp.zeros_like(acc_ref)

    x = batch_ref[...].astype(jnp.float32)       # (tile_n, C) logits, cast on-chip
    t = targets_ref[...]                         # (tile_n, 1) int32 class ids
    tn, c = x.shape

    # One iota, reused by both the argmax and the one-hot gather.
    col = lax.broadcasted_iota(jnp.int32, (tn, c), 1)

    # ---- argmax over classes (first occurrence, like torch.argmax) ----
    # NOTE: an all-NaN row yields idx == C here instead of torch's behavior;
    # harmless for finite inputs.
    max_x = jnp.max(x, axis=-1, keepdims=True)                          # (tile_n, 1)
    idx = jnp.min(jnp.where(x == max_x, col, c), axis=-1, keepdims=True)
    idx_f = idx.astype(jnp.float32)

    # ---- per-sample cross entropy: CE_i = logsumexp(x_i) - x_i[target_i] ----
    lse = max_x + jnp.log(jnp.sum(jnp.exp(x - max_x), axis=-1, keepdims=True))
    tgt_logit = jnp.sum(jnp.where(col == t, x, 0.0), axis=-1, keepdims=True)
    values = lse - tgt_logit                                            # (tile_n, 1)

    # ---- alpha weighting ----
    tmp = values * (1.0 + alpha * jnp.abs(idx_f - t.astype(jnp.float32)))

    # ---- accumulate raw sum (1/N applied once, in the wrapper) ----
    if needs_mask:
        start = (p * bpc + j) * tile_n          # logical row offset of this block

        @pl.when(start + tile_n <= n_samples)   # full in-range block: no mask work
        def _full():
            acc_ref[...] = acc_ref[...] + jnp.sum(tmp)

        @pl.when(start + tile_n > n_samples)    # ragged / fully out-of-range block
        def _ragged():
            row = lax.broadcasted_iota(jnp.int32, (tn, 1), 0) + start
            # Select (NOT multiply-by-zero): tail rows may hold garbage inf/NaN.
            acc_ref[...] = acc_ref[...] + jnp.sum(
                jnp.where(row < n_samples, tmp, 0.0))
    else:
        acc_ref[...] = acc_ref[...] + jnp.sum(tmp)

    @pl.when(j == bpc - 1)
    def _finalize():
        out_ref[...] = acc_ref[...]             # per-core raw partial sum


def alpha_loss_without_norm(batch, targets, alpha=1.0, tile_n=None, num_parallel=2):
    """batch: (N, C) logits (any float dtype); targets: (N,) class ids (float or int).

    NOTE: out-of-range targets silently contribute tgt_logit = 0 (torch raises);
    float targets truncate toward zero like torch's .long().
    """
    N, C = batch.shape
    itemsize = jnp.dtype(batch.dtype).itemsize

    # Sublane granularity for the input dtype (f32: 8, bf16: 16, 8-bit: 32).
    min_rows = max(8, 32 // max(itemsize, 1))
    c_lanes = _round_up(max(C, 1), 128)          # lane padding of a logits row in VMEM

    # Per-core VMEM capacity (generation-aware), with a conservative fallback.
    try:
        vmem_cap = int(pltpu.get_tpu_info().vmem_capacity_bytes)
    except Exception:
        vmem_cap = 64 * 1024 * 1024

    # Per-row VMEM footprint of one grid step:
    #   2 double-buffered logits blocks (lane-padded)            -> 2 * c_lanes * itemsize
    #   2 double-buffered targets blocks ((tile_n,1) int32 pads
    #     to a full 128-lane row = 512 B/row)                    -> 2 * 128 * 4
    #   ~3 full-block f32 temporaries (f32 cast, x-max, exp)     -> 3 * c_lanes * 4
    #   per-row (tile_n,1) vectors / slack                       -> 1024
    per_row = 2 * c_lanes * itemsize + 2 * 128 * 4 + 3 * c_lanes * 4 + 1024

    if tile_n is None:
        vmem_budget = min(int(vmem_cap * 0.35), 48 * 1024 * 1024)
        tile_from_vmem = max(min_rows, vmem_budget // per_row)
        # ~4 MiB of *actual* HBM traffic per grid step amortizes the fixed
        # ~0.35us per-step overhead to <10% of step time.
        tile_from_hbm = max(min_rows, (4 * 1024 * 1024) // max(C * itemsize, 1))
        tile_n = min(tile_from_vmem, tile_from_hbm)
    tile_n = _round_up(min(tile_n, _round_up(N, min_rows)), min_rows)

    num_blocks = _cdiv(N, tile_n)
    # Leading "parallel" axis: shards row blocks across TensorCores on v7x.
    # Harmless (serial) on 1-TC chips.
    P = num_parallel if num_blocks >= 2 else 1
    bpc = _cdiv(num_blocks, P)                   # row blocks per core
    needs_mask = (P * bpc * tile_n != N)         # compile-time: any ragged/extra block?

    targets_i = targets.astype(jnp.int32).reshape(N, 1)

    last_block = num_blocks - 1
    if P * bpc == num_blocks:
        def row_block(p, j):
            return p * bpc + j
    else:
        # Extra steps re-read the last valid block (DMA stays in-bounds); the
        # logical-index mask in the kernel zeroes their contribution.
        def row_block(p, j):
            return jnp.minimum(p * bpc + j, last_block)

    kernel = functools.partial(
        alpha_loss_kernel, alpha=float(alpha), n_samples=N,
        tile_n=tile_n, bpc=bpc, needs_mask=needs_mask,
    )

    # Scoped-VMEM limit: one grid step's footprint plus headroom, clamped to HW.
    footprint = tile_n * per_row + (1 << 20)
    vmem_limit = int(min(vmem_cap, max(footprint + (8 << 20), 32 << 20)))

    cost = pl.CostEstimate(
        flops=8 * N * C,
        transcendentals=N * C,
        bytes_accessed=N * C * itemsize + N * 4 + P * 8 * 128 * 4,
    )

    out = pl.pallas_call(
        kernel,
        out_shape=jax.ShapeDtypeStruct((P, 8, 128), jnp.float32),
        grid_spec=pltpu.PrefetchScalarGridSpec(
            num_scalar_prefetch=0,
            grid=(P, bpc),
            in_specs=[
                pl.BlockSpec((tile_n, C), lambda p, j: (row_block(p, j), 0)),
                pl.BlockSpec((tile_n, 1), lambda p, j: (row_block(p, j), 0)),
            ],
            out_specs=pl.BlockSpec((1, 8, 128), lambda p, j: (p, 0, 0)),
            scratch_shapes=[pltpu.VMEM((1, 8, 128), jnp.float32)],
        ),
        compiler_params=pltpu.CompilerParams(
            dimension_semantics=("parallel", "arbitrary"),
            vmem_limit_bytes=vmem_limit,
        ),
        cost_estimate=cost,
    )(batch, targets_i)

    # Per-core raw partial sums -> mean (divide by N exactly once).
    return jnp.sum(out[:, 0, 0]) / jnp.float32(N)


def _reference(batch, targets, alpha=1.0):
    # Pure-JAX reference of the PyTorch module.
    indices = jnp.argmax(batch, -1).astype(jnp.float32)
    lse = jax.scipy.special.logsumexp(batch.astype(jnp.float32), axis=-1)
    tgt = jnp.take_along_axis(
        batch.astype(jnp.float32), targets.astype(jnp.int32)[:, None], axis=-1
    )[:, 0]
    values = lse - tgt
    tmp = values * (1.0 + alpha * jnp.abs(indices - targets.astype(jnp.float32)))
    return jnp.mean(tmp)


if __name__ == "__main__":
    key = jax.random.PRNGKey(0)
    k1, k2, k3, k4 = jax.random.split(key, 4)

    # Case 1: small batch, N not a multiple of the tile -> exercises tail masking
    # on an UNPADDED ragged block.
    N1, C1 = 10, 32
    b1 = jax.random.normal(k1, (N1, C1), dtype=jnp.float32)
    t1 = jax.random.randint(k2, (N1,), 0, C1).astype(jnp.float32)
    loss1 = jax.block_until_ready(alpha_loss_without_norm(b1, t1, alpha=1.0))
    ref1 = _reference(b1, t1, alpha=1.0)
    assert jnp.allclose(loss1, ref1, rtol=1e-5, atol=1e-5), (loss1, ref1)

    # Case 2: forced small tile -> multiple blocks, 2-way parallel core axis with
    # an odd block count (exercises the clamped index_map + per-core partials).
    N2, C2 = 40, 48
    b2 = jax.random.normal(k3, (N2, C2), dtype=jnp.float32)
    t2 = jax.random.randint(k4, (N2,), 0, C2).astype(jnp.float32)
    loss2 = jax.block_until_ready(
        alpha_loss_without_norm(b2, t2, alpha=0.5, tile_n=16)
    )
    ref2 = _reference(b2, t2, alpha=0.5)
    assert jnp.allclose(loss2, ref2, rtol=1e-5, atol=1e-5), (loss2, ref2)

    print("KERNEL_OK")
</pallas_src>

<mosaic_0001>
module attributes {stable_mosaic.version = 11 : i64} {
  func.func @alpha_loss_kernel(%arg0: i32, %arg1: i32, %arg2: memref<16x32xf32, #tpu.memory_space<vmem>>, %arg3: memref<16x1xi32, #tpu.memory_space<vmem>>, %arg4: memref<1x8x128xf32, #tpu.memory_space<vmem>>, %arg5: memref<1x8x128xf32, #tpu.memory_space<vmem>>) attributes {dimension_semantics = [#tpu.dimension_semantics<parallel>, #tpu.dimension_semantics<arbitrary>], iteration_bounds = array<i64: 1, 1>, scalar_prefetch = 0 : i64, scratch_operands = 1 : i64, tpu.core_type = #tpu.core_type<tc>, window_params = [{transform_indices = @transform_0, window_bounds = array<i64: 16, 32>}, {transform_indices = @transform_1, window_bounds = array<i64: 16, 1>}, {transform_indices = @transform_2, window_bounds = array<i64: 1, 8, 128>}]} {
    %c0_i32 = arith.constant 0 : i32
    %0 = arith.cmpi eq, %arg1, %c0_i32 : i32
    %1 = arith.extui %0 : i1 to i32
    %c0_i32_0 = arith.constant 0 : i32
    %2 = arith.cmpi ne, %1, %c0_i32_0 : i32
    scf.if %2 {
      %cst_17 = arith.constant 0.000000e+00 : f32
      %51 = vector.broadcast %cst_17 : f32 to vector<1x8x128xf32>
      %c0_18 = arith.constant 0 : index
      %c0_19 = arith.constant 0 : index
      %c0_20 = arith.constant 0 : index
      %52 = vector.load %arg5[%c0_18, %c0_19, %c0_20] : memref<1x8x128xf32, #tpu.memory_space<vmem>>, vector<1x8x128xf32>
      tpu.vector_store %arg5[%c0_18, %c0_19, %c0_20], %51 {strides = array<i32>} : memref<1x8x128xf32, #tpu.memory_space<vmem>>, vector<1x8x128xf32>,
    } else {
    }
    %c0 = arith.constant 0 : index
    %c0_1 = arith.constant 0 : index
    %3 = vector.load %arg2[%c0, %c0_1] : memref<16x32xf32, #tpu.memory_space<vmem>>, vector<16x32xf32>
    %c0_2 = arith.constant 0 : index
    %c0_3 = arith.constant 0 : index
    %4 = vector.load %arg3[%c0_2, %c0_3] : memref<16x1xi32, #tpu.memory_space<vmem>>, vector<16x1xi32>
    %5 = tpu.iota {dimensions = array<i32: 1>} : vector<16x32xi32>
    %cst = arith.constant dense<0xFF800000> : vector<16xf32>
    %6 = vector.multi_reduction <maximumf>, %3, %cst [1] : vector<16x32xf32> to vector<16xf32>
    %7 = vector.shape_cast %6 : vector<16xf32> to vector<16x1xf32>
    %8 = vector.broadcast %7 : vector<16x1xf32> to vector<16x32xf32>
    %9 = arith.cmpf oeq, %3, %8 : vector<16x32xf32>
    %c32_i32 = arith.constant 32 : i32
    %10 = vector.broadcast %c32_i32 : i32 to vector<16x32xi32>
    %11 = arith.select %9, %5, %10 : vector<16x32xi1>, vector<16x32xi32>
    %cst_4 = arith.constant dense<2147483647> : vector<16xi32>
    %12 = vector.multi_reduction <minsi>, %11, %cst_4 [1] : vector<16x32xi32> to vector<16xi32>
    %13 = vector.shape_cast %12 : vector<16xi32> to vector<16x1xi32>
    %14 = arith.sitofp %13 : vector<16x1xi32> to vector<16x1xf32>
    %15 = vector.broadcast %7 : vector<16x1xf32> to vector<16x32xf32>
    %16 = arith.subf %3, %15 : vector<16x32xf32>
    %17 = math.exp %16 : vector<16x32xf32>
    %cst_5 = arith.constant dense<0.000000e+00> : vector<16xf32>
    %18 = vector.multi_reduction <add>, %17, %cst_5 [1] : vector<16x32xf32> to vector<16xf32>
    %19 = vector.shape_cast %18 : vector<16xf32> to vector<16x1xf32>
    %20 = math.log %19 : vector<16x1xf32>
    %21 = arith.addf %7, %20 : vector<16x1xf32>
    %22 = vector.broadcast %4 : vector<16x1xi32> to vector<16x32xi32>
    %23 = arith.cmpi eq, %5, %22 : vector<16x32xi32>
    %cst_6 = arith.constant 0.000000e+00 : f32
    %24 = vector.broadcast %cst_6 : f32 to vector<16x32xf32>
    %25 = arith.select %23, %3, %24 : vector<16x32xi1>, vector<16x32xf32>
    %cst_7 = arith.constant dense<0.000000e+00> : vector<16xf32>
    %26 = vector.multi_reduction <add>, %25, %cst_7 [1] : vector<16x32xf32> to vector<16xf32>
    %27 = vector.shape_cast %26 : vector<16xf32> to vector<16x1xf32>
    %28 = arith.subf %21, %27 : vector<16x1xf32>
    %29 = arith.sitofp %4 : vector<16x1xi32> to vector<16x1xf32>
    %30 = arith.subf %14, %29 : vector<16x1xf32>
    %31 = math.absf %30 : vector<16x1xf32>
    %cst_8 = arith.constant 1.000000e+00 : f32
    %32 = vector.broadcast %cst_8 : f32 to vector<16x1xf32>
    %33 = arith.mulf %32, %31 : vector<16x1xf32>
    %cst_9 = arith.constant 1.000000e+00 : f32
    %34 = vector.broadcast %cst_9 : f32 to vector<16x1xf32>
    %35 = arith.addf %34, %33 : vector<16x1xf32>
    %36 = arith.mulf %28, %35 : vector<16x1xf32>
    %c1_i32 = arith.constant 1 : i32
    %37 = arith.muli %arg0, %c1_i32 : i32
    %38 = arith.addi %37, %arg1 : i32
    %c16_i32 = arith.constant 16 : i32
    %39 = arith.muli %38, %c16_i32 : i32
    %c16_i32_10 = arith.constant 16 : i32
    %40 = arith.addi %39, %c16_i32_10 : i32
    %c10_i32 = arith.constant 10 : i32
    %41 = arith.cmpi sle, %40, %c10_i32 : i32
    %42 = arith.extui %41 : i1 to i32
    %c0_i32_11 = arith.constant 0 : i32
    %43 = arith.cmpi ne, %42, %c0_i32_11 : i32
    scf.if %43 {
      %c0_17 = arith.constant 0 : index
      %c0_18 = arith.constant 0 : index
      %c0_19 = arith.constant 0 : index
      %51 = vector.load %arg5[%c0_17, %c0_18, %c0_19] : memref<1x8x128xf32, #tpu.memory_space<vmem>>, vector<1x8x128xf32>
      %52 = vector.shape_cast %36 : vector<16x1xf32> to vector<1x16x1xf32>
      %cst_20 = arith.constant dense<0.000000e+00> : vector<1xf32>
      %53 = vector.multi_reduction <add>, %52, %cst_20 [1, 2] : vector<1x16x1xf32> to vector<1xf32>
      %54 = vector.shape_cast %53 : vector<1xf32> to vector<1x1x1xf32>
      %55 = vector.extract %54[0, 0, 0] : f32 from vector<1x1x1xf32>
      %56 = vector.broadcast %55 : f32 to vector<1x8x128xf32>
      %57 = arith.addf %51, %56 : vector<1x8x128xf32>
      %c0_21 = arith.constant 0 : index
      %c0_22 = arith.constant 0 : index
      %c0_23 = arith.constant 0 : index
      %58 = vector.load %arg5[%c0_21, %c0_22, %c0_23] : memref<1x8x128xf32, #tpu.memory_space<vmem>>, vector<1x8x128xf32>
      tpu.vector_store %arg5[%c0_21, %c0_22, %c0_23], %57 {strides = array<i32>} : memref<1x8x128xf32, #tpu.memory_space<vmem>>, vector<1x8x128xf32>,
    } else {
    }
    %c16_i32_12 = arith.constant 16 : i32
    %44 = arith.addi %39, %c16_i32_12 : i32
    %c10_i32_13 = arith.constant 10 : i32
    %45 = arith.cmpi sgt, %44, %c10_i32_13 : i32
    %46 = arith.extui %45 : i1 to i32
    %c0_i32_14 = arith.constant 0 : i32
    %47 = arith.cmpi ne, %46, %c0_i32_14 : i32
    scf.if %47 {
      %51 = tpu.iota {dimensions = array<i32: 0>} : vector<16x1xi32>
      %52 = vector.broadcast %39 : i32 to vector<16x1xi32>
      %53 = arith.addi %51, %52 : vector<16x1xi32>
      %c0_17 = arith.constant 0 : index
      %c0_18 = arith.constant 0 : index
      %c0_19 = arith.constant 0 : index
      %54 = vector.load %arg5[%c0_17, %c0_18, %c0_19] : memref<1x8x128xf32, #tpu.memory_space<vmem>>, vector<1x8x128xf32>
      %c10_i32_20 = arith.constant 10 : i32
      %55 = vector.broadcast %c10_i32_20 : i32 to vector<16x1xi32>
      %56 = arith.cmpi slt, %53, %55 : vector<16x1xi32>
      %cst_21 = arith.constant 0.000000e+00 : f32
      %57 = vector.broadcast %cst_21 : f32 to vector<16x1xf32>
      %58 = arith.select %56, %36, %57 : vector<16x1xi1>, vector<16x1xf32>
      %59 = vector.shape_cast %58 : vector<16x1xf32> to vector<1x16x1xf32>
      %cst_22 = arith.constant dense<0.000000e+00> : vector<1xf32>
      %60 = vector.multi_reduction <add>, %59, %cst_22 [1, 2] : vector<1x16x1xf32> to vector<1xf32>
      %61 = vector.shape_cast %60 : vector<1xf32> to vector<1x1x1xf32>
      %62 = vector.extract %61[0, 0, 0] : f32 from vector<1x1x1xf32>
      %63 = vector.broadcast %62 : f32 to vector<1x8x128xf32>
      %64 = arith.addf %54, %63 : vector<1x8x128xf32>
      %c0_23 = arith.constant 0 : index
      %c0_24 = arith.constant 0 : index
      %c0_25 = arith.constant 0 : index
      %65 = vector.load %arg5[%c0_23, %c0_24, %c0_25] : memref<1x8x128xf32, #tpu.memory_space<vmem>>, vector<1x8x128xf32>
      tpu.vector_store %arg5[%c0_23, %c0_24, %c0_25], %64 {strides = array<i32>} : memref<1x8x128xf32, #tpu.memory_space<vmem>>, vector<1x8x128xf32>,
    } else {
    }
    %c0_i32_15 = arith.constant 0 : i32
    %48 = arith.cmpi eq, %arg1, %c0_i32_15 : i32
    %49 = arith.extui %48 : i1 to i32
    %c0_i32_16 = arith.constant 0 : i32
    %50 = arith.cmpi ne, %49, %c0_i32_16 : i32
    scf.if %50 {
      %c0_17 = arith.constant 0 : index
      %c0_18 = arith.constant 0 : index
      %c0_19 = arith.constant 0 : index
      %51 = vector.load %arg5[%c0_17, %c0_18, %c0_19] : memref<1x8x128xf32, #tpu.memory_space<vmem>>, vector<1x8x128xf32>
      %c0_20 = arith.constant 0 : index
      %c0_21 = arith.constant 0 : index
      %c0_22 = arith.constant 0 : index
      %52 = vector.load %arg4[%c0_20, %c0_21, %c0_22] : memref<1x8x128xf32, #tpu.memory_space<vmem>>, vector<1x8x128xf32>
      tpu.vector_store %arg4[%c0_20, %c0_21, %c0_22], %51 {strides = array<i32>} : memref<1x8x128xf32, #tpu.memory_space<vmem>>, vector<1x8x128xf32>,
    } else {
    }
    return
  }
  func.func @transform_0(%arg0: i32, %arg1: i32) -> (i32, i32) {
    %c1_i32 = arith.constant 1 : i32
    %0 = arith.muli %arg0, %c1_i32 : i32
    %1 = arith.addi %0, %arg1 : i32
    %c0_i32 = arith.constant 0 : i32
    %c0_i32_0 = arith.constant 0 : i32
    return %1, %c0_i32 : i32, i32
  }
  func.func @transform_1(%arg0: i32, %arg1: i32) -> (i32, i32) {
    %c1_i32 = arith.constant 1 : i32
    %0 = arith.muli %arg0, %c1_i32 : i32
    %1 = arith.addi %0, %arg1 : i32
    %c0_i32 = arith.constant 0 : i32
    %c0_i32_0 = arith.constant 0 : i32
    return %1, %c0_i32 : i32, i32
  }
  func.func @transform_2(%arg0: i32, %arg1: i32) -> (i32, i32, i32) {
    %c0_i32 = arith.constant 0 : i32
    %c0_i32_0 = arith.constant 0 : i32
    %c0_i32_1 = arith.constant 0 : i32
    return %arg0, %c0_i32, %c0_i32_0 : i32, i32, i32
  }
}

</mosaic_0001>

<llo_original>
// kernel: tpu_custom_call.1
$region0: #{tpu_custom_call.1}
  #allocation0 [shape = 'u32[]', space=smem, size = 0x4, offset = 0x4, fixed_abs, tag = 'smem constant byte address 0x4 - core index']
  #allocation1 [shape = 'u32[144,128]{1,0:T(1,128)}', space=vmem, size = 0x12000, scoped, tag = 'internal scratch']
  #allocation2 [shape = 'f32[1,8,128]{2,1,0:T(8,128)}', space=vmem, size = 0x1000, scoped, tag = 'scratch operand']
  %s0 = inlined_call_operand.vmem [shape: f32[10,32], index: 0, kind: input, shape index: {}]
  %s1 = inlined_call_operand.vmem [shape: s32[10,1], index: 1, kind: input, shape index: {}]
  %s2 = inlined_call_operand.hbm [shape: f32[1,8,128], index: 2, kind: output, shape index: {}]
  %s3 = sld [smem:[#allocation0]]
  $region34: #{tpu_custom_call.1} parent=0
    _
  %s5 = ssub.s32 1, %s3
  %s6 = scalar_select 0, %s5, %s3
  $region1: #{tpu_custom_call.1} parent=0
    #allocation3 [shape = 'u8[4096]{0}', space=vmem, size = 0x1000, scoped, tag = 'output window, operand 0, single buffered']
    #allocation4 [shape = 's32[1]{0}', space=sflag, size = 0x4, scoped, tag = 'scoped memory for tpu_custom_call.1']
    %7 = vsyncpa [#allocation4], 0
    // Predicated region
    $region2: #{tpu_custom_call.1} parent=1 // pred_check
      _
    $region3: #{tpu_custom_call.1} parent=1 // pred_check_branch
      %9 = sbr.rel (0) target = $region5
    $region4: #{tpu_custom_call.1} parent=1 // pred_region
      %s10 = sadd.s32 0, 0
      %s11 = smul.u32 2, %s10
      %p12 = scmp.lt.s32.totalorder %s11, 1
      %s13 = scalar_select %p12, %s11, 1
      %s14 = smul.addr %s13, 8
      %s15 = scalar_lea.vmem %s0, %s14
      %s16 = sadd.s32 0, 0
      %s17 = smul.u32 2, %s16
    $region5: #{tpu_custom_call.1} parent=1 // pred_fallthru
      _
    // Predicated region
    $region6: #{tpu_custom_call.1} parent=1 // pred_check
      _
    $region7: #{tpu_custom_call.1} parent=1 // pred_check_branch
      %19 = sbr.rel (0) target = $region9
    $region8: #{tpu_custom_call.1} parent=1 // pred_region
      %s20 = sadd.s32 0, 0
      %s21 = smul.u32 2, %s20
      %p22 = scmp.lt.s32.totalorder %s21, 1
      %s23 = scalar_select %p22, %s21, 1
      %s24 = smul.addr %s23, 8
      %s25 = scalar_lea.vmem %s1, %s24
      %s26 = sadd.s32 0, 0
      %s27 = smul.u32 2, %s26
    $region9: #{tpu_custom_call.1} parent=1 // pred_fallthru
      _
    %s28 = sadd.s32 0, 0
    %s29 = smul.u32 2, %s28
    %p30 = scmp.lt.s32.totalorder %s29, 1
    %s31 = scalar_select %p30, %s29, 1
    %s32 = smul.addr %s31, 8
    %s33 = scalar_lea.vmem %s0, %s32
    %s34 = sadd.s32 0, 0
    %s35 = smul.u32 2, %s34
    %p36 = scmp.lt.s32.totalorder %s35, 1
    %s37 = scalar_select %p36, %s35, 1
    %s38 = smul.addr %s37, 8
    %s39 = scalar_lea.vmem %s1, %s38
    %s40 = sadd.s32 0, 0
    %s41 = smul.u32 2, %s40
    %p42 = scmp.lt.s32.totalorder %s41, 1
    %s43 = scalar_select %p42, %s41, 1
    %s44 = smul.addr %s43, 8
    %s45 = scalar_lea.vmem %s0, %s44
    %s46 = sadd.s32 0, 0
    %s47 = smul.u32 2, %s46
    %s48 = sadd.s32 0, 0
    %s49 = smul.u32 2, %s48
    %p50 = scmp.lt.s32.totalorder %s49, 1
    %s51 = scalar_select %p50, %s49, 1
    %s52 = smul.addr %s51, 8
    %s53 = scalar_lea.vmem %s1, %s52
    %s54 = sadd.s32 0, 0
    %s55 = smul.u32 2, %s54
    %p56 = scmp.eq.s32.totalorder 0, 0
    // Predicated region
    $region10: #{tpu_custom_call.1} parent=1 // pred_check
      %p57 = pneg %p56
    $region11: #{tpu_custom_call.1} parent=1 // pred_check_branch
      %59 = sbr.rel (%p57) target = $region13
    $region12: #{tpu_custom_call.1} parent=1 // pred_region
      %60 = vst [vmem:[#allocation2] sm:$0xff] 0.0
    $region13: #{tpu_custom_call.1} parent=1 // pred_fallthru
      _
    %v61 = vld [vmem:[%s45] sm:$0xff]
    %v62 = vld [vmem:[%s45 + $0x8] sm:$0xff]
    %v63 = vld [vmem:[%s53] sm:$0xff]
    %v64 = vld [vmem:[%s53 + $0x8] sm:$0xff]
    %v65 = vlaneseq
    %v66 = vand.u32 %v65, 127
    %vm67 = vcmask 261120
    %v68 = vsel %vm67, %v61, -inf
    %69 = vmax.xlane.f32.xlu0 %v68
    %v70 = vpop.xlane.xlu0 %69
    %v71 = vsel %vm67, %v62, -inf
    %72 = vmax.xlane.f32.xlu0 %v71
    %v73 = vpop.xlane.xlu0 %72
    %vm74 = vcmp.eq.f32.partialorder %v61, %v70
    %vm75 = vcmp.eq.f32.partialorder %v62, %v73
    %v76 = vsel %vm74, %v66, 32
    %v77 = vsel %vm75, %v66, 32
    %v78 = vsel %vm67, %v76, 2147483647
    %v79 = vand.u32 %v78, 65535
    %v80 = vshra.s32 %v78, 16
    %v81 = vcvt.s32.f32 %v79
    %v82 = vcvt.s32.f32 %v80
    %83 = vmin.xlane.f32.xlu0 %v82
    %v84 = vpop.xlane.xlu0 %83
    %vm85 = vcmp.eq.f32.partialorder %v82, %v84
    %v86 = vsel %vm85, %v81, inf
    %87 = vmin.xlane.f32.xlu0 %v86
    %v88 = vpop.xlane.xlu0 %87
    %v89 = vcvt.f32.s32 %v88
    %v90 = vcvt.f32.s32 %v84
    %v91 = vshll.u32 %v90, 16
    %v92 = vadd.s32 %v91, %v89
    %v93 = vsel %vm67, %v77, 2147483647
    %v94 = vand.u32 %v93, 65535
    %v95 = vshra.s32 %v93, 16
    %v96 = vcvt.s32.f32 %v94
    %v97 = vcvt.s32.f32 %v95
    %98 = vmin.xlane.f32.xlu0 %v97
    %v99 = vpop.xlane.xlu0 %98
    %vm100 = vcmp.eq.f32.partialorder %v97, %v99
    %v101 = vsel %vm100, %v96, inf
    %102 = vmin.xlane.f32.xlu0 %v101
    %v103 = vpop.xlane.xlu0 %102
    %v104 = vcvt.f32.s32 %v103
    %v105 = vcvt.f32.s32 %v99
    %v106 = vshll.u32 %v105, 16
    %v107 = vadd.s32 %v106, %v104
    %v108 = vcvt.s32.f32 %v92
    %v109 = vcvt.s32.f32 %v107
    %v110 = vsub.f32 %v61, %v70
    %v111 = vsub.f32 %v62, %v73
    %v112 = vmul.f32 %v110, 1.442695
    %v113 = vpow.pop %v112
    %v114 = vmul.f32 %v111, 1.442695
    %v115 = vpow.pop %v114
    %v116 = vsel %vm67, %v113, 0.0
    %117 = vadd.xlane.f32.xlu0 %v116
    %v118 = vpop.xlane.xlu0 %117
    %v119 = vsel %vm67, %v115, 0.0
    %120 = vadd.xlane.f32.xlu0 %v119
    %v121 = vpop.xlane.xlu0 %120
    %v122 = vlog2.pop %v118
    %v123 = vmul.f32 %v122, 0.6931472
    %v124 = vlog2.pop %v121
    %v125 = vmul.f32 %v124, 0.6931472
    %v126 = vadd.f32 %v70, %v123
    %v127 = vadd.f32 %v73, %v125
    %128 = vset.pattern.permute.xlu0 0
    %129 = vperm.xlu0 %128, %v63
    %v130 = vpop.permute.xlu0 %129
    %131 = vset.pattern.permute.xlu0 0
    %132 = vperm.xlu0 %131, %v64
    %v133 = vpop.permute.xlu0 %132
    %vm134 = vcmp.eq.s32.totalorder %v66, %v130
    %vm135 = vcmp.eq.s32.totalorder %v66, %v133
    %v136 = vsel %vm134, %v61, 0.0
    %v137 = vsel %vm135, %v62, 0.0
    %v138 = vsel %vm67, %v136, 0.0
    %139 = vadd.xlane.f32.xlu0 %v138
    %v140 = vpop.xlane.xlu0 %139
    %v141 = vsel %vm67, %v137, 0.0
    %142 = vadd.xlane.f32.xlu0 %v141
    %v143 = vpop.xlane.xlu0 %142
    %v144 = vsub.f32 %v126, %v140
    %v145 = vsub.f32 %v127, %v143
    %v146 = vcvt.s32.f32 %v63
    %v147 = vcvt.s32.f32 %v64
    %v148 = vsub.f32 %v108, %v146
    %v149 = vsub.f32 %v109, %v147
    %v150 = vand.u32 2147483647, %v148
    %v151 = vand.u32 2147483647, %v149
    %v152 = vadd.f32 %v150, 1.0
    %v153 = vadd.f32 %v151, 1.0
    %v154 = vmul.f32 %v144, %v152
    %v155 = vmul.f32 %v145, %v153
    %s156 = sadd.s32 0, 0
    %s157 = smul.u32 %s156, 16
    %s158 = sadd.s32 %s157, 16
    %p159 = scmp.le.s32.totalorder %s158, 10
    // Predicated region
    $region14: #{tpu_custom_call.1} parent=1 // pred_check
      %p160 = pneg %p159
    $region15: #{tpu_custom_call.1} parent=1 // pred_check_branch
      %162 = sbr.rel (%p160) target = $region17
    $region16: #{tpu_custom_call.1} parent=1 // pred_region
      %v163 = vld [vmem:[#allocation2] sm:$0xff]
      %vm164 = vcmask 7168
      %v165 = vsel %vm164, %v154, 0.0
      %v166 = vsel %vm164, %v155, 0.0
      %v167 = vadd.f32 %v165, %v166
      %168 = vadd.xlane.f32.xlu0 %v167
      %v169 = vpop.xlane.xlu0 %168
      %v170 = vrot.slane %v169, 4
      %v171 = vadd.f32 %v169, %v170
      %v172 = vrot.slane %v171, 2
      %v173 = vadd.f32 %v171, %v172
      %v174 = vrot.slane %v173, 1
      %v175 = vadd.f32 %v173, %v174
      %s176 = vtos %v175
      %v177 = vstv %s176
      %v178 = vadd.f32 %v163, %v177
      %179 = vst [vmem:[#allocation2] sm:$0xff] %v178
    $region17: #{tpu_custom_call.1} parent=1 // pred_fallthru
      _
    %p180 = scmp.gt.s32.totalorder %s158, 10
    // Predicated region
    $region18: #{tpu_custom_call.1} parent=1 // pred_check
      %p181 = pneg %p180
    $region19: #{tpu_custom_call.1} parent=1 // pred_check_branch
      %183 = sbr.rel (%p181) target = $region21
    $region20: #{tpu_custom_call.1} parent=1 // pred_region
      %v184 = vlaneseq
      %v185 = vshrl.u32 %v184, 7
      %v186 = vadd.s32 %v185, 8
      %v187 = vstv %s157
      %v188 = vadd.s32 %v185, %v187
      %v189 = vadd.s32 %v186, %v187
      %v190 = vld [vmem:[#allocation2] sm:$0xff]
      %vm191 = vcmp.lt.s32.totalorder %v188, 10
      %vm192 = vcmp.lt.s32.totalorder %v189, 10
      %v193 = vsel %vm191, %v154, 0.0
      %v194 = vsel %vm192, %v155, 0.0
      %vm195 = vcmask 7168
      %v196 = vsel %vm195, %v193, 0.0
      %v197 = vsel %vm195, %v194, 0.0
      %v198 = vadd.f32 %v196, %v197
      %199 = vadd.xlane.f32.xlu0 %v198
      %v200 = vpop.xlane.xlu0 %199
      %v201 = vrot.slane %v200, 4
      %v202 = vadd.f32 %v200, %v201
      %v203 = vrot.slane %v202, 2
      %v204 = vadd.f32 %v202, %v203
      %v205 = vrot.slane %v204, 1
      %v206 = vadd.f32 %v204, %v205
      %s207 = vtos %v206
      %v208 = vstv %s207
      %v209 = vadd.f32 %v190, %v208
      %210 = vst [vmem:[#allocation2] sm:$0xff] %v209
    $region21: #{tpu_custom_call.1} parent=1 // pred_fallthru
      _
    // Predicated region
    $region22: #{tpu_custom_call.1} parent=1 // pred_check
      %p211 = pneg %p56
    $region23: #{tpu_custom_call.1} parent=1 // pred_check_branch
      %213 = sbr.rel (%p211) target = $region25
    $region24: #{tpu_custom_call.1} parent=1 // pred_region
      %v214 = vld [vmem:[#allocation2] sm:$0xff]
      %215 = vst [vmem:[#allocation3] sm:$0xff] %v214
    $region25: #{tpu_custom_call.1} parent=1 // pred_fallthru
      _
    // Predicated region
    $region26: #{tpu_custom_call.1} parent=1 // pred_check
      _
    $region27: #{tpu_custom_call.1} parent=1 // pred_check_branch
      %217 = sbr.rel (0) target = $region29
    $region28: #{tpu_custom_call.1} parent=1 // pred_region
      %s219 = ssub.s32 128, 128
      %220 = vsyncadd [#allocation4], %s219
      %s222 = sshll.u32 [#allocation3], 4
      %s223 = int_to_ptr.vmem [resolvable:$true] %s222
      %225 = dma.vmem_to_hbm [thread:$0]  %s223, 128, %s2, [#allocation4]
    $region29: #{tpu_custom_call.1} parent=1 // pred_fallthru
      _
    // Predicated region
    $region30: #{tpu_custom_call.1} parent=1 // pred_check
      _
    $region31: #{tpu_custom_call.1} parent=1 // pred_check_branch
      %227 = sbr.rel (0) target = $region33
    $region32: #{tpu_custom_call.1} parent=1 // pred_region
      %228 = dma.done [#allocation4], 128
    $region33: #{tpu_custom_call.1} parent=1 // pred_fallthru
      _
    %229 = vsyncpa [#allocation4], 1

</llo_original>
